<compile_context>
chip_gen: v5e
topology: v5e:2x2
jax: 0.10.0
libtpu: 0.0.40
codegen_flags: <defaults>
</compile_context>

<pallas_src>
import jax
import jax.numpy as jnp
from jax.experimental import pallas as pl
from jax.experimental.pallas import tpu as pltpu

# --- module hyperparameters ---------------------------------------------------
# TODO(synk): env.state_size comes from the external `env` object; a synthetic
#             value of 16 is used here.
STATE_SIZE = 16
H1, H2, H3, OUT = 256, 128, 64, 1
TB = 256  # batch tile (sweep 256-1024; 256 keeps small batches cheap to pad)


def munet_kernel(x_ref,
                 w1_ref, b1_ref,
                 w2_ref, b2_ref,
                 w3_ref, b3_ref,
                 w4t_ref, b4_ref,
                 o_ref):
    bf16 = jnp.bfloat16

    # fc1 + tanh: bf16 MXU matmul, f32 accumulation, f32 bias/tanh (VPU/EUP)
    h = jnp.tanh(
        jnp.dot(x_ref[...], w1_ref[...], preferred_element_type=jnp.float32)
        + b1_ref[...])
    # fc2 + tanh
    h = jnp.tanh(
        jnp.dot(h.astype(bf16), w2_ref[...],
                preferred_element_type=jnp.float32)
        + b2_ref[...])
    # fc3 + tanh
    h = jnp.tanh(
        jnp.dot(h.astype(bf16), w3_ref[...],
                preferred_element_type=jnp.float32)
        + b3_ref[...])
    # fc_mu (out_features == 1): keep it OFF the MXU.  Broadcast the (1, 64)
    # weight row, multiply on the VPU and lane-reduce on the XLU.
    mu = jnp.tanh(
        jnp.sum(h * w4t_ref[...], axis=-1, keepdims=True) + b4_ref[...])
    o_ref[...] = mu.astype(o_ref.dtype)


def munet_forward(x, params, *, tb=TB):
    """x: (B, STATE_SIZE) float32, params: dict of weights/biases (float32)."""
    B, S = x.shape
    n_tiles = pl.cdiv(B, tb)
    b_pad = n_tiles * tb
    if b_pad != B:  # pad instead of asserting so any batch size works
        x = jnp.pad(x, ((0, b_pad - B), (0, 0)))

    bf16 = jnp.bfloat16
    xb = x.astype(bf16)
    w1 = params["w1"].astype(bf16)
    w2 = params["w2"].astype(bf16)
    w3 = params["w3"].astype(bf16)
    b1, b2, b3 = params["b1"], params["b2"], params["b3"]
    w4t = params["w4"].T          # (1, 64), stays f32 (VPU path, not MXU)
    b4 = params["b4"]             # (1, 1)

    full = lambda a: pl.BlockSpec(a.shape, lambda i: (0, 0))

    out = pl.pallas_call(
        munet_kernel,
        out_shape=jax.ShapeDtypeStruct((b_pad, OUT), jnp.float32),
        grid=(n_tiles,),
        in_specs=[
            pl.BlockSpec((tb, S), lambda i: (i, 0)),   # x tile
            full(w1), full(b1),
            full(w2), full(b2),
            full(w3), full(b3),
            full(w4t), full(b4),
        ],
        out_specs=pl.BlockSpec((tb, OUT), lambda i: (i, 0)),
        compiler_params=pltpu.CompilerParams(
            dimension_semantics=("parallel",),
            vmem_limit_bytes=16 * 1024 * 1024),
    )(xb, w1, b1, w2, b2, w3, b3, w4t, b4)

    return out[:B]


def init_params(key):
    """Deterministic init mimicking PyTorch Linear default: U(-1/sqrt(fan_in), +)."""
    def linear(key, fan_in, fan_out):
        kw, kb = jax.random.split(key)
        bound = 1.0 / jnp.sqrt(jnp.float32(fan_in))
        w = jax.random.uniform(kw, (fan_in, fan_out), jnp.float32, -bound, bound)
        b = jax.random.uniform(kb, (1, fan_out), jnp.float32, -bound, bound)
        return w, b

    k1, k2, k3, k4 = jax.random.split(key, 4)
    w1, b1 = linear(k1, STATE_SIZE, H1)
    w2, b2 = linear(k2, H1, H2)
    w3, b3 = linear(k3, H2, H3)
    w4, b4 = linear(k4, H3, OUT)
    return dict(w1=w1, b1=b1, w2=w2, b2=b2, w3=w3, b3=b3, w4=w4, b4=b4)


def munet_ref(x, p):
    """Pure-JAX reference mirroring the kernel math (bf16 matmuls, f32 accum)."""
    bf16 = jnp.bfloat16
    h = jnp.tanh(jnp.dot(x.astype(bf16), p["w1"].astype(bf16),
                         preferred_element_type=jnp.float32) + p["b1"])
    h = jnp.tanh(jnp.dot(h.astype(bf16), p["w2"].astype(bf16),
                         preferred_element_type=jnp.float32) + p["b2"])
    h = jnp.tanh(jnp.dot(h.astype(bf16), p["w3"].astype(bf16),
                         preferred_element_type=jnp.float32) + p["b3"])
    return jnp.tanh(jnp.sum(h * p["w4"].T, axis=-1, keepdims=True) + p["b4"])


if __name__ == "__main__":
    key = jax.random.PRNGKey(0)
    kp, kx = jax.random.split(key)
    params = init_params(kp)

    B = 6  # small batch, deliberately NOT a multiple of TB (exercises padding)
    x = jax.random.normal(kx, (B, STATE_SIZE), jnp.float32)

    mu = jax.block_until_ready(munet_forward(x, params))
    ref = munet_ref(x, params)

    assert mu.shape == (B, OUT)
    assert jnp.allclose(mu, ref, atol=2e-3, rtol=2e-3), "mismatch vs reference"

    print("KERNEL_OK")
</pallas_src>

<mosaic_0001>
module attributes {stable_mosaic.version = 11 : i64} {
  func.func @munet_kernel(%arg0: i32, %arg1: memref<256x16xbf16, #tpu.memory_space<vmem>>, %arg2: memref<16x256xbf16, #tpu.memory_space<vmem>>, %arg3: memref<1x256xf32, #tpu.memory_space<vmem>>, %arg4: memref<256x128xbf16, #tpu.memory_space<vmem>>, %arg5: memref<1x128xf32, #tpu.memory_space<vmem>>, %arg6: memref<128x64xbf16, #tpu.memory_space<vmem>>, %arg7: memref<1x64xf32, #tpu.memory_space<vmem>>, %arg8: memref<1x64xf32, #tpu.memory_space<vmem>>, %arg9: memref<1x1xf32, #tpu.memory_space<vmem>>, %arg10: memref<256x1xf32, #tpu.memory_space<vmem>>) attributes {dimension_semantics = [#tpu.dimension_semantics<parallel>], iteration_bounds = array<i64: 1>, scalar_prefetch = 0 : i64, scratch_operands = 0 : i64, tpu.core_type = #tpu.core_type<tc>, window_params = [{transform_indices = @transform_0, window_bounds = array<i64: 256, 16>}, {pipeline_mode = #tpu.pipeline_mode<synchronous>, transform_indices = @transform_1, window_bounds = array<i64: 16, 256>}, {pipeline_mode = #tpu.pipeline_mode<synchronous>, transform_indices = @transform_2, window_bounds = array<i64: 1, 256>}, {pipeline_mode = #tpu.pipeline_mode<synchronous>, transform_indices = @transform_3, window_bounds = array<i64: 256, 128>}, {pipeline_mode = #tpu.pipeline_mode<synchronous>, transform_indices = @transform_4, window_bounds = array<i64: 1, 128>}, {pipeline_mode = #tpu.pipeline_mode<synchronous>, transform_indices = @transform_5, window_bounds = array<i64: 128, 64>}, {pipeline_mode = #tpu.pipeline_mode<synchronous>, transform_indices = @transform_6, window_bounds = array<i64: 1, 64>}, {pipeline_mode = #tpu.pipeline_mode<synchronous>, transform_indices = @transform_7, window_bounds = array<i64: 1, 64>}, {pipeline_mode = #tpu.pipeline_mode<synchronous>, transform_indices = @transform_8, window_bounds = array<i64: 1, 1>}, {transform_indices = @transform_9, window_bounds = array<i64: 256, 1>}]} {
    %c0 = arith.constant 0 : index
    %c0_0 = arith.constant 0 : index
    %0 = vector.load %arg1[%c0, %c0_0] : memref<256x16xbf16, #tpu.memory_space<vmem>>, vector<256x16xbf16>
    %c0_1 = arith.constant 0 : index
    %c0_2 = arith.constant 0 : index
    %1 = vector.load %arg2[%c0_1, %c0_2] : memref<16x256xbf16, #tpu.memory_space<vmem>>, vector<16x256xbf16>
    %cst = arith.constant dense<0.000000e+00> : vector<256x256xf32>
    %2 = tpu.matmul %0, %1, %cst {dimension_numbers = #tpu.dot_dimension_numbers<[1], [0], [0], [1], [0, 0, 1, 1], [], []>} : vector<256x16xbf16>, vector<16x256xbf16>, vector<256x256xf32> -> vector<256x256xf32>
    %c0_3 = arith.constant 0 : index
    %c0_4 = arith.constant 0 : index
    %3 = vector.load %arg3[%c0_3, %c0_4] : memref<1x256xf32, #tpu.memory_space<vmem>>, vector<1x256xf32>
    %4 = vector.broadcast %3 : vector<1x256xf32> to vector<256x256xf32>
    %5 = arith.addf %2, %4 : vector<256x256xf32>
    %6 = math.tanh %5 : vector<256x256xf32>
    %7 = arith.truncf %6 : vector<256x256xf32> to vector<256x256xbf16>
    %c0_5 = arith.constant 0 : index
    %c0_6 = arith.constant 0 : index
    %8 = vector.load %arg4[%c0_5, %c0_6] : memref<256x128xbf16, #tpu.memory_space<vmem>>, vector<256x128xbf16>
    %cst_7 = arith.constant dense<0.000000e+00> : vector<256x128xf32>
    %9 = tpu.matmul %7, %8, %cst_7 {dimension_numbers = #tpu.dot_dimension_numbers<[1], [0], [0], [1], [0, 0, 1, 1], [], []>} : vector<256x256xbf16>, vector<256x128xbf16>, vector<256x128xf32> -> vector<256x128xf32>
    %c0_8 = arith.constant 0 : index
    %c0_9 = arith.constant 0 : index
    %10 = vector.load %arg5[%c0_8, %c0_9] : memref<1x128xf32, #tpu.memory_space<vmem>>, vector<1x128xf32>
    %11 = vector.broadcast %10 : vector<1x128xf32> to vector<256x128xf32>
    %12 = arith.addf %9, %11 : vector<256x128xf32>
    %13 = math.tanh %12 : vector<256x128xf32>
    %14 = arith.truncf %13 : vector<256x128xf32> to vector<256x128xbf16>
    %c0_10 = arith.constant 0 : index
    %c0_11 = arith.constant 0 : index
    %15 = vector.load %arg6[%c0_10, %c0_11] : memref<128x64xbf16, #tpu.memory_space<vmem>>, vector<128x64xbf16>
    %cst_12 = arith.constant dense<0.000000e+00> : vector<256x64xf32>
    %16 = tpu.matmul %14, %15, %cst_12 {dimension_numbers = #tpu.dot_dimension_numbers<[1], [0], [0], [1], [0, 0, 1, 1], [], []>} : vector<256x128xbf16>, vector<128x64xbf16>, vector<256x64xf32> -> vector<256x64xf32>
    %c0_13 = arith.constant 0 : index
    %c0_14 = arith.constant 0 : index
    %17 = vector.load %arg7[%c0_13, %c0_14] : memref<1x64xf32, #tpu.memory_space<vmem>>, vector<1x64xf32>
    %18 = vector.broadcast %17 : vector<1x64xf32> to vector<256x64xf32>
    %19 = arith.addf %16, %18 : vector<256x64xf32>
    %20 = math.tanh %19 : vector<256x64xf32>
    %c0_15 = arith.constant 0 : index
    %c0_16 = arith.constant 0 : index
    %21 = vector.load %arg8[%c0_15, %c0_16] : memref<1x64xf32, #tpu.memory_space<vmem>>, vector<1x64xf32>
    %22 = vector.broadcast %21 : vector<1x64xf32> to vector<256x64xf32>
    %23 = arith.mulf %20, %22 : vector<256x64xf32>
    %cst_17 = arith.constant dense<0.000000e+00> : vector<256xf32>
    %24 = vector.multi_reduction <add>, %23, %cst_17 [1] : vector<256x64xf32> to vector<256xf32>
    %25 = vector.shape_cast %24 : vector<256xf32> to vector<256x1xf32>
    %c0_18 = arith.constant 0 : index
    %c0_19 = arith.constant 0 : index
    %26 = vector.load %arg9[%c0_18, %c0_19] : memref<1x1xf32, #tpu.memory_space<vmem>>, vector<1x1xf32>
    %27 = vector.broadcast %26 : vector<1x1xf32> to vector<256x1xf32>
    %28 = arith.addf %25, %27 : vector<256x1xf32>
    %29 = math.tanh %28 : vector<256x1xf32>
    %c0_20 = arith.constant 0 : index
    %c0_21 = arith.constant 0 : index
    %30 = vector.load %arg10[%c0_20, %c0_21] : memref<256x1xf32, #tpu.memory_space<vmem>>, vector<256x1xf32>
    tpu.vector_store %arg10[%c0_20, %c0_21], %29 {strides = array<i32>} : memref<256x1xf32, #tpu.memory_space<vmem>>, vector<256x1xf32>,
    return
  }
  func.func @transform_0(%arg0: i32) -> (i32, i32) {
    %c0_i32 = arith.constant 0 : i32
    %c0_i32_0 = arith.constant 0 : i32
    return %arg0, %c0_i32 : i32, i32
  }
  func.func @transform_1(%arg0: i32) -> (i32, i32) {
    %c0_i32 = arith.constant 0 : i32
    %c0_i32_0 = arith.constant 0 : i32
    %c0_i32_1 = arith.constant 0 : i32
    return %c0_i32, %c0_i32_0 : i32, i32
  }
  func.func @transform_2(%arg0: i32) -> (i32, i32) {
    %c0_i32 = arith.constant 0 : i32
    %c0_i32_0 = arith.constant 0 : i32
    %c0_i32_1 = arith.constant 0 : i32
    return %c0_i32, %c0_i32_0 : i32, i32
  }
  func.func @transform_3(%arg0: i32) -> (i32, i32) {
    %c0_i32 = arith.constant 0 : i32
    %c0_i32_0 = arith.constant 0 : i32
    %c0_i32_1 = arith.constant 0 : i32
    return %c0_i32, %c0_i32_0 : i32, i32
  }
  func.func @transform_4(%arg0: i32) -> (i32, i32) {
    %c0_i32 = arith.constant 0 : i32
    %c0_i32_0 = arith.constant 0 : i32
    %c0_i32_1 = arith.constant 0 : i32
    return %c0_i32, %c0_i32_0 : i32, i32
  }
  func.func @transform_5(%arg0: i32) -> (i32, i32) {
    %c0_i32 = arith.constant 0 : i32
    %c0_i32_0 = arith.constant 0 : i32
    %c0_i32_1 = arith.constant 0 : i32
    return %c0_i32, %c0_i32_0 : i32, i32
  }
  func.func @transform_6(%arg0: i32) -> (i32, i32) {
    %c0_i32 = arith.constant 0 : i32
    %c0_i32_0 = arith.constant 0 : i32
    %c0_i32_1 = arith.constant 0 : i32
    return %c0_i32, %c0_i32_0 : i32, i32
  }
  func.func @transform_7(%arg0: i32) -> (i32, i32) {
    %c0_i32 = arith.constant 0 : i32
    %c0_i32_0 = arith.constant 0 : i32
    %c0_i32_1 = arith.constant 0 : i32
    return %c0_i32, %c0_i32_0 : i32, i32
  }
  func.func @transform_8(%arg0: i32) -> (i32, i32) {
    %c0_i32 = arith.constant 0 : i32
    %c0_i32_0 = arith.constant 0 : i32
    %c0_i32_1 = arith.constant 0 : i32
    return %c0_i32, %c0_i32_0 : i32, i32
  }
  func.func @transform_9(%arg0: i32) -> (i32, i32) {
    %c0_i32 = arith.constant 0 : i32
    %c0_i32_0 = arith.constant 0 : i32
    return %arg0, %c0_i32 : i32, i32
  }
}

</mosaic_0001>

<llo_original>
// kernel: tpu_custom_call.1
$region0: #{tpu_custom_call.1}
  #allocation0 [shape = 'u32[]', space=smem, size = 0x4, offset = 0x4, fixed_abs, tag = 'smem constant byte address 0x4 - core index']
  #allocation1 [shape = 'u32[72,128]{1,0:T(1,128)}', space=vmem, size = 0x9000, scoped, tag = 'internal scratch']
  #allocation2 [shape = 'f32[1,1]{1,0:T(1,128)S(1)}', space=vmem, size = 0x200, scoped, tag = 'scoped memory for tpu_custom_call.1']
  %s0 = inlined_call_operand.vmem [shape: bf16[256,16], index: 0, kind: input, shape index: {}]
  %s1 = inlined_call_operand.vmem [shape: bf16[16,256], index: 1, kind: input, shape index: {}]
  %s2 = inlined_call_operand.vmem [shape: f32[1,256], index: 2, kind: input, shape index: {}]
  %s3 = inlined_call_operand.vmem [shape: bf16[256,128], index: 3, kind: input, shape index: {}]
  %s4 = inlined_call_operand.vmem [shape: f32[1,128], index: 4, kind: input, shape index: {}]
  %s5 = inlined_call_operand.vmem [shape: bf16[128,64], index: 5, kind: input, shape index: {}]
  %s6 = inlined_call_operand.vmem [shape: f32[1,64], index: 6, kind: input, shape index: {}]
  %s7 = inlined_call_operand.vmem [shape: f32[1,64], index: 7, kind: input, shape index: {}]
  %s8 = inlined_call_operand.<no memory space> [shape: f32[1,1], index: 8, kind: input, shape index: {}]
  %s9 = inlined_call_operand.vmem [shape: f32[256,1], index: 9, kind: output, shape index: {}]
  %s10 = sld [smem:[#allocation0]]
  $region46: #{tpu_custom_call.1} parent=0
    _
  %s12 = ssub.s32 1, %s10
  %s13 = scalar_select 0, %s12, %s10
  %v14 = vstv %s8
  %15 = vst [vmem:[#allocation2] sm:$0x1] %v14
  // Predicated region
  $region2: #{tpu_custom_call.1} parent=0 // pred_check
    _
  $region3: #{tpu_custom_call.1} parent=0 // pred_check_branch
    %17 = sbr.rel (0) target = $region5
  $region4: #{tpu_custom_call.1} parent=0 // pred_region
    _
  $region5: #{tpu_custom_call.1} parent=0 // pred_fallthru
    _
  // Predicated region
  $region6: #{tpu_custom_call.1} parent=0 // pred_check
    _
  $region7: #{tpu_custom_call.1} parent=0 // pred_check_branch
    %19 = sbr.rel (0) target = $region9
  $region8: #{tpu_custom_call.1} parent=0 // pred_region
    _
  $region9: #{tpu_custom_call.1} parent=0 // pred_fallthru
    _
  // Predicated region
  $region10: #{tpu_custom_call.1} parent=0 // pred_check
    _
  $region11: #{tpu_custom_call.1} parent=0 // pred_check_branch
    %21 = sbr.rel (0) target = $region13
  $region12: #{tpu_custom_call.1} parent=0 // pred_region
    _
  $region13: #{tpu_custom_call.1} parent=0 // pred_fallthru
    _
  // Predicated region
  $region14: #{tpu_custom_call.1} parent=0 // pred_check
    _
  $region15: #{tpu_custom_call.1} parent=0 // pred_check_branch
    %23 = sbr.rel (0) target = $region17
  $region16: #{tpu_custom_call.1} parent=0 // pred_region
    _
  $region17: #{tpu_custom_call.1} parent=0 // pred_fallthru
    _
  // Predicated region
  $region18: #{tpu_custom_call.1} parent=0 // pred_check
    _
  $region19: #{tpu_custom_call.1} parent=0 // pred_check_branch
    %25 = sbr.rel (0) target = $region21
  $region20: #{tpu_custom_call.1} parent=0 // pred_region
    _
  $region21: #{tpu_custom_call.1} parent=0 // pred_fallthru
    _
  // Predicated region
  $region22: #{tpu_custom_call.1} parent=0 // pred_check
    _
  $region23: #{tpu_custom_call.1} parent=0 // pred_check_branch
    %27 = sbr.rel (0) target = $region25
  $region24: #{tpu_custom_call.1} parent=0 // pred_region
    _
  $region25: #{tpu_custom_call.1} parent=0 // pred_fallthru
    _
  // Predicated region
  $region26: #{tpu_custom_call.1} parent=0 // pred_check
    _
  $region27: #{tpu_custom_call.1} parent=0 // pred_check_branch
    %29 = sbr.rel (0) target = $region29
  $region28: #{tpu_custom_call.1} parent=0 // pred_region
    _
  $region29: #{tpu_custom_call.1} parent=0 // pred_fallthru
    _
  // Predicated region
  $region30: #{tpu_custom_call.1} parent=0 // pred_check
    _
  $region31: #{tpu_custom_call.1} parent=0 // pred_check_branch
    %31 = sbr.rel (0) target = $region33
  $region32: #{tpu_custom_call.1} parent=0 // pred_region
    _
  $region33: #{tpu_custom_call.1} parent=0 // pred_fallthru
    _
  // Predicated region
  $region34: #{tpu_custom_call.1} parent=0 // pred_check
    _
  $region35: #{tpu_custom_call.1} parent=0 // pred_check_branch
    %33 = sbr.rel (0) target = $region37
  $region36: #{tpu_custom_call.1} parent=0 // pred_region
    _
  $region37: #{tpu_custom_call.1} parent=0 // pred_fallthru
    _
  %v35 = vld [vmem:[%s0] sm:$0xf]
  %v36 = vld [vmem:[%s0 + $0x4] sm:$0xf]
  %v37 = vld [vmem:[%s0 + $0x8] sm:$0xf]
  %v38 = vld [vmem:[%s0 + $0xc] sm:$0xf]
  %v39 = vld [vmem:[%s0 + $0x10] sm:$0xf]
  %v40 = vld [vmem:[%s0 + $0x14] sm:$0xf]
  %v41 = vld [vmem:[%s0 + $0x18] sm:$0xf]
  %v42 = vld [vmem:[%s0 + $0x1c] sm:$0xf]
  %v43 = vld [vmem:[%s0 + $0x20] sm:$0xf]
  %v44 = vld [vmem:[%s0 + $0x24] sm:$0xf]
  %v45 = vld [vmem:[%s0 + $0x28] sm:$0xf]
  %v46 = vld [vmem:[%s0 + $0x2c] sm:$0xf]
  %v47 = vld [vmem:[%s0 + $0x30] sm:$0xf]
  %v48 = vld [vmem:[%s0 + $0x34] sm:$0xf]
  %v49 = vld [vmem:[%s0 + $0x38] sm:$0xf]
  %v50 = vld [vmem:[%s0 + $0x3c] sm:$0xf]
  %v51 = vld [vmem:[%s0 + $0x40] sm:$0xf]
  %v52 = vld [vmem:[%s0 + $0x44] sm:$0xf]
  %v53 = vld [vmem:[%s0 + $0x48] sm:$0xf]
  %v54 = vld [vmem:[%s0 + $0x4c] sm:$0xf]
  %v55 = vld [vmem:[%s0 + $0x50] sm:$0xf]
  %v56 = vld [vmem:[%s0 + $0x54] sm:$0xf]
  %v57 = vld [vmem:[%s0 + $0x58] sm:$0xf]
  %v58 = vld [vmem:[%s0 + $0x5c] sm:$0xf]
  %v59 = vld [vmem:[%s0 + $0x60] sm:$0xf]
  %v60 = vld [vmem:[%s0 + $0x64] sm:$0xf]
  %v61 = vld [vmem:[%s0 + $0x68] sm:$0xf]
  %v62 = vld [vmem:[%s0 + $0x6c] sm:$0xf]
  %v63 = vld [vmem:[%s0 + $0x70] sm:$0xf]
  %v64 = vld [vmem:[%s0 + $0x74] sm:$0xf]
  %v65 = vld [vmem:[%s0 + $0x78] sm:$0xf]
  %v66 = vld [vmem:[%s0 + $0x7c] sm:$0xf]
  %v67 = vld [vmem:[%s1] sm:$0xff]
  %v68 = vld [vmem:[%s1 + $0x8] sm:$0xff]
  %v69 = vld [vmem:[%s2] sm:$0x3]
  %v71 = vperm.slane %v69, 0
  %v72 = vperm.slane %v69, 1
  %v107 = vunpack.c.l.b16 %v35
  %v108 = vunpack.c.l.b16 %v36
  %v109 = vunpack.c.l.b16 %v37
  %v110 = vunpack.c.l.b16 %v38
  %v111 = vunpack.c.l.b16 %v39
  %v112 = vunpack.c.l.b16 %v40
  %v113 = vunpack.c.l.b16 %v41
  %v114 = vunpack.c.l.b16 %v42
  %v115 = vunpack.c.l.b16 %v43
  %v116 = vunpack.c.l.b16 %v44
  %v117 = vunpack.c.l.b16 %v45
  %v118 = vunpack.c.l.b16 %v46
  %v119 = vunpack.c.l.b16 %v47
  %v120 = vunpack.c.l.b16 %v48
  %v121 = vunpack.c.l.b16 %v49
  %v122 = vunpack.c.l.b16 %v50
  %v123 = vunpack.c.l.b16 %v51
  %v124 = vunpack.c.l.b16 %v52
  %v125 = vunpack.c.l.b16 %v53
  %v126 = vunpack.c.l.b16 %v54
  %v127 = vunpack.c.l.b16 %v55
  %v128 = vunpack.c.l.b16 %v56
  %v129 = vunpack.c.l.b16 %v57
  %v130 = vunpack.c.l.b16 %v58
  %v131 = vunpack.c.l.b16 %v59
  %v132 = vunpack.c.l.b16 %v60
  %v133 = vunpack.c.l.b16 %v61
  %v134 = vunpack.c.l.b16 %v62
  %v135 = vunpack.c.l.b16 %v63
  %v136 = vunpack.c.l.b16 %v64
  %v137 = vunpack.c.l.b16 %v65
  %v138 = vunpack.c.l.b16 %v66
  %v139 = vpack.c.b16 %v108, %v107
  %v140 = vpack.c.b16 %v110, %v109
  %v141 = vpack.c.b16 %v112, %v111
  %v142 = vpack.c.b16 %v114, %v113
  %v143 = vpack.c.b16 %v116, %v115
  %v144 = vpack.c.b16 %v118, %v117
  %v145 = vpack.c.b16 %v120, %v119
  %v146 = vpack.c.b16 %v122, %v121
  %v147 = vpack.c.b16 %v124, %v123
  %v148 = vpack.c.b16 %v126, %v125
  %v149 = vpack.c.b16 %v128, %v127
  %v150 = vpack.c.b16 %v130, %v129
  %v151 = vpack.c.b16 %v132, %v131
  %v152 = vpack.c.b16 %v134, %v133
  %v153 = vpack.c.b16 %v136, %v135
  %v154 = vpack.c.b16 %v138, %v137
  %v157 = vunpack.c.l.b16 %v67
  %v158 = vunpack.c.h.b16 %v67
  %v159 = vunpack.c.l.b16 %v68
  %v160 = vunpack.c.h.b16 %v68
  %v161 = vpack.c.b16 %v159, %v157
  %v162 = vpack.c.b16 %v160, %v158
  %vm165 = vcmask 130048
  %v167 = vsel %vm165, %v139, 0
  %v170 = vsel %vm165, %v140, 0
  %v173 = vsel %vm165, %v141, 0
  %v176 = vsel %vm165, %v142, 0
  %v179 = vsel %vm165, %v143, 0
  %v182 = vsel %vm165, %v144, 0
  %v185 = vsel %vm165, %v145, 0
  %v188 = vsel %vm165, %v146, 0
  %v191 = vsel %vm165, %v147, 0
  %v194 = vsel %vm165, %v148, 0
  %v197 = vsel %vm165, %v149, 0
  %v200 = vsel %vm165, %v150, 0
  %v203 = vsel %vm165, %v151, 0
  %v206 = vsel %vm165, %v152, 0
  %v209 = vsel %vm165, %v153, 0
  %v212 = vsel %vm165, %v154, 0
  %214 = vmatpush.bf16.msra.mxu0 0
  %215 = vmatpush.bf16.msra.mxu0 0
  %216 = vmatpush.bf16.msra.mxu0 0
  %217 = vmatpush.bf16.msra.mxu0 0
  %218 = vmatpush.bf16.msra.mxu0 0
  %219 = vmatpush.bf16.msra.mxu0 0
  %220 = vmatpush.bf16.msra.mxu0 0
  %221 = vmatpush.bf16.msra.mxu0 %v161
  %222 = vmatmul.bf16.gmra.mxu0 %v167
  %v223 = vpop.f32.mrf.mxu0
  %v224 = vadd.f32 %v71, %v223
  %v225 = vpop.f32.mrf.mxu0
  %v226 = vadd.f32 %v71, %v225
  %227 = vmatmul.bf16.gmra.mxu0 %v170
  %v228 = vpop.f32.mrf.mxu0
  %v229 = vadd.f32 %v71, %v228
  %v230 = vpop.f32.mrf.mxu0
  %v231 = vadd.f32 %v71, %v230
  %232 = vmatmul.bf16.gmra.mxu0 %v173
  %v233 = vpop.f32.mrf.mxu0
  %v234 = vadd.f32 %v71, %v233
  %v235 = vpop.f32.mrf.mxu0
  %v236 = vadd.f32 %v71, %v235
  %237 = vmatmul.bf16.gmra.mxu0 %v176
  %v238 = vpop.f32.mrf.mxu0
  %v239 = vadd.f32 %v71, %v238
  %v240 = vpop.f32.mrf.mxu0
  %v241 = vadd.f32 %v71, %v240
  %242 = vmatmul.bf16.gmra.mxu0 %v179
  %v243 = vpop.f32.mrf.mxu0
  %v244 = vadd.f32 %v71, %v243
  %v245 = vpop.f32.mrf.mxu0
  %v246 = vadd.f32 %v71, %v245
  %247 = vmatmul.bf16.gmra.mxu0 %v182
  %v248 = vpop.f32.mrf.mxu0
  %v249 = vadd.f32 %v71, %v248
  %v250 = vpop.f32.mrf.mxu0
  %v251 = vadd.f32 %v71, %v250
  %252 = vmatmul.bf16.gmra.mxu0 %v185
  %v253 = vpop.f32.mrf.mxu0
  %v254 = vadd.f32 %v71, %v253
  %v255 = vpop.f32.mrf.mxu0
  %v256 = vadd.f32 %v71, %v255
  %257 = vmatmul.bf16.gmra.mxu0 %v188
  %v258 = vpop.f32.mrf.mxu0
  %v259 = vadd.f32 %v71, %v258
  %v260 = vpop.f32.mrf.mxu0
  %v261 = vadd.f32 %v71, %v260
  %262 = vmatmul.bf16.gmra.mxu0 %v191
  %v263 = vpop.f32.mrf.mxu0
  %v264 = vadd.f32 %v71, %v263
  %v265 = vpop.f32.mrf.mxu0
  %v266 = vadd.f32 %v71, %v265
  %267 = vmatmul.bf16.gmra.mxu0 %v194
  %v268 = vpop.f32.mrf.mxu0
  %v269 = vadd.f32 %v71, %v268
  %v270 = vpop.f32.mrf.mxu0
  %v271 = vadd.f32 %v71, %v270
  %272 = vmatmul.bf16.gmra.mxu0 %v197
  %v273 = vpop.f32.mrf.mxu0
  %v274 = vadd.f32 %v71, %v273
  %v275 = vpop.f32.mrf.mxu0
  %v276 = vadd.f32 %v71, %v275
  %277 = vmatmul.bf16.gmra.mxu0 %v200
  %v278 = vpop.f32.mrf.mxu0
  %v279 = vadd.f32 %v71, %v278
  %v280 = vpop.f32.mrf.mxu0
  %v281 = vadd.f32 %v71, %v280
  %282 = vmatmul.bf16.gmra.mxu0 %v203
  %v283 = vpop.f32.mrf.mxu0
  %v284 = vadd.f32 %v71, %v283
  %v285 = vpop.f32.mrf.mxu0
  %v286 = vadd.f32 %v71, %v285
  %287 = vmatmul.bf16.gmra.mxu0 %v206
  %v288 = vpop.f32.mrf.mxu0
  %v289 = vadd.f32 %v71, %v288
  %v290 = vpop.f32.mrf.mxu0
  %v291 = vadd.f32 %v71, %v290
  %292 = vmatmul.bf16.gmra.mxu0 %v209
  %v293 = vpop.f32.mrf.mxu0
  %v294 = vadd.f32 %v71, %v293
  %v295 = vpop.f32.mrf.mxu0
  %v296 = vadd.f32 %v71, %v295
  %297 = vmatmul.bf16.gmra.mxu0 %v212
  %v298 = vpop.f32.mrf.mxu0
  %v299 = vadd.f32 %v71, %v298
  %v300 = vpop.f32.mrf.mxu0
  %v301 = vadd.f32 %v71, %v300
  %302 = vdwg.mxu0
  %303 = vmatpush.bf16.msra.mxu0 0
  %304 = vmatpush.bf16.msra.mxu0 0
  %305 = vmatpush.bf16.msra.mxu0 0
  %306 = vmatpush.bf16.msra.mxu0 0
  %307 = vmatpush.bf16.msra.mxu0 0
  %308 = vmatpush.bf16.msra.mxu0 0
  %309 = vmatpush.bf16.msra.mxu0 0
  %310 = vmatpush.bf16.msra.mxu0 %v162
  %311 = vmatmul.bf16.gmra.mxu0 %v167
  %v312 = vpop.f32.mrf.mxu0
  %v313 = vadd.f32 %v72, %v312
  %v314 = vpop.f32.mrf.mxu0
  %v315 = vadd.f32 %v72, %v314
  %316 = vmatmul.bf16.gmra.mxu0 %v170
  %v317 = vpop.f32.mrf.mxu0
  %v318 = vadd.f32 %v72, %v317
  %v319 = vpop.f32.mrf.mxu0
  %v320 = vadd.f32 %v72, %v319
  %321 = vmatmul.bf16.gmra.mxu0 %v173
  %v322 = vpop.f32.mrf.mxu0
  %v323 = vadd.f32 %v72, %v322
  %v324 = vpop.f32.mrf.mxu0
  %v325 = vadd.f32 %v72, %v324
  %326 = vmatmul.bf16.gmra.mxu0 %v176
  %v327 = vpop.f32.mrf.mxu0
  %v328 = vadd.f32 %v72, %v327
  %v329 = vpop.f32.mrf.mxu0
  %v330 = vadd.f32 %v72, %v329
  %331 = vmatmul.bf16.gmra.mxu0 %v179
  %v332 = vpop.f32.mrf.mxu0
  %v333 = vadd.f32 %v72, %v332
  %v334 = vpop.f32.mrf.mxu0
  %v335 = vadd.f32 %v72, %v334
  %336 = vmatmul.bf16.gmra.mxu0 %v182
  %v337 = vpop.f32.mrf.mxu0
  %v338 = vadd.f32 %v72, %v337
  %v339 = vpop.f32.mrf.mxu0
  %v340 = vadd.f32 %v72, %v339
  %341 = vmatmul.bf16.gmra.mxu0 %v185
  %v342 = vpop.f32.mrf.mxu0
  %v343 = vadd.f32 %v72, %v342
  %v344 = vpop.f32.mrf.mxu0
  %v345 = vadd.f32 %v72, %v344
  %346 = vmatmul.bf16.gmra.mxu0 %v188
  %v347 = vpop.f32.mrf.mxu0
  %v348 = vadd.f32 %v72, %v347
  %v349 = vpop.f32.mrf.mxu0
  %v350 = vadd.f32 %v72, %v349
  %351 = vmatmul.bf16.gmra.mxu0 %v191
  %v352 = vpop.f32.mrf.mxu0
  %v353 = vadd.f32 %v72, %v352
  %v354 = vpop.f32.mrf.mxu0
  %v355 = vadd.f32 %v72, %v354
  %356 = vmatmul.bf16.gmra.mxu0 %v194
  %v357 = vpop.f32.mrf.mxu0
  %v358 = vadd.f32 %v72, %v357
  %v359 = vpop.f32.mrf.mxu0
  %v360 = vadd.f32 %v72, %v359
  %361 = vmatmul.bf16.gmra.mxu0 %v197
  %v362 = vpop.f32.mrf.mxu0
  %v363 = vadd.f32 %v72, %v362
  %v364 = vpop.f32.mrf.mxu0
  %v365 = vadd.f32 %v72, %v364
  %366 = vmatmul.bf16.gmra.mxu0 %v200
  %v367 = vpop.f32.mrf.mxu0
  %v368 = vadd.f32 %v72, %v367
  %v369 = vpop.f32.mrf.mxu0
  %v370 = vadd.f32 %v72, %v369
  %371 = vmatmul.bf16.gmra.mxu0 %v203
  %v372 = vpop.f32.mrf.mxu0
  %v373 = vadd.f32 %v72, %v372
  %v374 = vpop.f32.mrf.mxu0
  %v375 = vadd.f32 %v72, %v374
  %376 = vmatmul.bf16.gmra.mxu0 %v206
  %v377 = vpop.f32.mrf.mxu0
  %v378 = vadd.f32 %v72, %v377
  %v379 = vpop.f32.mrf.mxu0
  %v380 = vadd.f32 %v72, %v379
  %381 = vmatmul.bf16.gmra.mxu0 %v209
  %v382 = vpop.f32.mrf.mxu0
  %v383 = vadd.f32 %v72, %v382
  %v384 = vpop.f32.mrf.mxu0
  %v385 = vadd.f32 %v72, %v384
  %386 = vmatmul.bf16.gmra.mxu0 %v212
  %v387 = vpop.f32.mrf.mxu0
  %v388 = vadd.f32 %v72, %v387
  %v389 = vpop.f32.mrf.mxu0
  %v390 = vadd.f32 %v72, %v389
  %391 = vdwg.mxu0
  %v392 = vtanh.pop %v224
  %v393 = vtanh.pop %v313
  %v394 = vtanh.pop %v226
  %v395 = vtanh.pop %v315
  %v396 = vtanh.pop %v229
  %v397 = vtanh.pop %v318
  %v398 = vtanh.pop %v231
  %v399 = vtanh.pop %v320
  %v400 = vtanh.pop %v234
  %v401 = vtanh.pop %v323
  %v402 = vtanh.pop %v236
  %v403 = vtanh.pop %v325
  %v404 = vtanh.pop %v239
  %v405 = vtanh.pop %v328
  %v406 = vtanh.pop %v241
  %v407 = vtanh.pop %v330
  %v408 = vtanh.pop %v244
  %v409 = vtanh.pop %v333
  %v410 = vtanh.pop %v246
  %v411 = vtanh.pop %v335
  %v412 = vtanh.pop %v249
  %v413 = vtanh.pop %v338
  %v414 = vtanh.pop %v251
  %v415 = vtanh.pop %v340
  %v416 = vtanh.pop %v254
  %v417 = vtanh.pop %v343
  %v418 = vtanh.pop %v256
  %v419 = vtanh.pop %v345
  %v420 = vtanh.pop %v259
  %v421 = vtanh.pop %v348
  %v422 = vtanh.pop %v261
  %v423 = vtanh.pop %v350
  %v424 = vtanh.pop %v264
  %v425 = vtanh.pop %v353
  %v426 = vtanh.pop %v266
  %v427 = vtanh.pop %v355
  %v428 = vtanh.pop %v269
  %v429 = vtanh.pop %v358
  %v430 = vtanh.pop %v271
  %v431 = vtanh.pop %v360
  %v432 = vtanh.pop %v274
  %v433 = vtanh.pop %v363
  %v434 = vtanh.pop %v276
  %v435 = vtanh.pop %v365
  %v436 = vtanh.pop %v279
  %v437 = vtanh.pop %v368
  %v438 = vtanh.pop %v281
  %v439 = vtanh.pop %v370
  %v440 = vtanh.pop %v284
  %v441 = vtanh.pop %v373
  %v442 = vtanh.pop %v286
  %v443 = vtanh.pop %v375
  %v444 = vtanh.pop %v289
  %v445 = vtanh.pop %v378
  %v446 = vtanh.pop %v291
  %v447 = vtanh.pop %v380
  %v448 = vtanh.pop %v294
  %v449 = vtanh.pop %v383
  %v450 = vtanh.pop %v296
  %v451 = vtanh.pop %v385
  %v452 = vtanh.pop %v299
  %v453 = vtanh.pop %v388
  %v454 = vtanh.pop %v301
  %v455 = vtanh.pop %v390
  %v456 = vpack.c.bf16 %v394, %v392
  %v457 = vpack.c.bf16 %v395, %v393
  %v458 = vpack.c.bf16 %v398, %v396
  %v459 = vpack.c.bf16 %v399, %v397
  %v460 = vpack.c.bf16 %v402, %v400
  %v461 = vpack.c.bf16 %v403, %v401
  %v462 = vpack.c.bf16 %v406, %v404
  %v463 = vpack.c.bf16 %v407, %v405
  %v464 = vpack.c.bf16 %v410, %v408
  %v465 = vpack.c.bf16 %v411, %v409
  %v466 = vpack.c.bf16 %v414, %v412
  %v467 = vpack.c.bf16 %v415, %v413
  %v468 = vpack.c.bf16 %v418, %v416
  %v469 = vpack.c.bf16 %v419, %v417
  %v470 = vpack.c.bf16 %v422, %v420
  %v471 = vpack.c.bf16 %v423, %v421
  %v472 = vpack.c.bf16 %v426, %v424
  %v473 = vpack.c.bf16 %v427, %v425
  %v474 = vpack.c.bf16 %v430, %v428
  %v475 = vpack.c.bf16 %v431, %v429
  %v476 = vpack.c.bf16 %v434, %v432
  %v477 = vpack.c.bf16 %v435, %v433
  %v478 = vpack.c.bf16 %v438, %v436
  %v479 = vpack.c.bf16 %v439, %v437
  %v480 = vpack.c.bf16 %v442, %v440
  %v481 = vpack.c.bf16 %v443, %v441
  %v482 = vpack.c.bf16 %v446, %v444
  %v483 = vpack.c.bf16 %v447, %v445
  %v484 = vpack.c.bf16 %v450, %v448
  %v485 = vpack.c.bf16 %v451, %v449
  %v486 = vpack.c.bf16 %v454, %v452
  %v487 = vpack.c.bf16 %v455, %v453
  %v488 = vld [vmem:[%s3] sm:$0xf]
  %v489 = vld [vmem:[%s3 + $0x4] sm:$0xf]
  %v490 = vld [vmem:[%s3 + $0x8] sm:$0xf]
  %v491 = vld [vmem:[%s3 + $0xc] sm:$0xf]
  %v492 = vld [vmem:[%s3 + $0x10] sm:$0xf]
  %v493 = vld [vmem:[%s3 + $0x14] sm:$0xf]
  %v494 = vld [vmem:[%s3 + $0x18] sm:$0xf]
  %v495 = vld [vmem:[%s3 + $0x1c] sm:$0xf]
  %v496 = vld [vmem:[%s3 + $0x20] sm:$0xf]
  %v497 = vld [vmem:[%s3 + $0x24] sm:$0xf]
  %v498 = vld [vmem:[%s3 + $0x28] sm:$0xf]
  %v499 = vld [vmem:[%s3 + $0x2c] sm:$0xf]
  %v500 = vld [vmem:[%s3 + $0x30] sm:$0xf]
  %v501 = vld [vmem:[%s3 + $0x34] sm:$0xf]
  %v502 = vld [vmem:[%s3 + $0x38] sm:$0xf]
  %v503 = vld [vmem:[%s3 + $0x3c] sm:$0xf]
  %v504 = vld [vmem:[%s3 + $0x40] sm:$0xf]
  %v505 = vld [vmem:[%s3 + $0x44] sm:$0xf]
  %v506 = vld [vmem:[%s3 + $0x48] sm:$0xf]
  %v507 = vld [vmem:[%s3 + $0x4c] sm:$0xf]
  %v508 = vld [vmem:[%s3 + $0x50] sm:$0xf]
  %v509 = vld [vmem:[%s3 + $0x54] sm:$0xf]
  %v510 = vld [vmem:[%s3 + $0x58] sm:$0xf]
  %v511 = vld [vmem:[%s3 + $0x5c] sm:$0xf]
  %v512 = vld [vmem:[%s3 + $0x60] sm:$0xf]
  %v513 = vld [vmem:[%s3 + $0x64] sm:$0xf]
  %v514 = vld [vmem:[%s3 + $0x68] sm:$0xf]
  %v515 = vld [vmem:[%s3 + $0x6c] sm:$0xf]
  %v516 = vld [vmem:[%s3 + $0x70] sm:$0xf]
  %v517 = vld [vmem:[%s3 + $0x74] sm:$0xf]
  %v518 = vld [vmem:[%s3 + $0x78] sm:$0xf]
  %v519 = vld [vmem:[%s3 + $0x7c] sm:$0xf]
  %v520 = vld [vmem:[%s4] sm:$0x1]
  %v522 = vperm.slane %v520, 0
  %v556 = vunpack.c.l.b16 %v488
  %v557 = vunpack.c.l.b16 %v489
  %v558 = vunpack.c.l.b16 %v490
  %v559 = vunpack.c.l.b16 %v491
  %v560 = vunpack.c.l.b16 %v492
  %v561 = vunpack.c.l.b16 %v493
  %v562 = vunpack.c.l.b16 %v494
  %v563 = vunpack.c.l.b16 %v495
  %v564 = vunpack.c.l.b16 %v496
  %v565 = vunpack.c.l.b16 %v497
  %v566 = vunpack.c.l.b16 %v498
  %v567 = vunpack.c.l.b16 %v499
  %v568 = vunpack.c.l.b16 %v500
  %v569 = vunpack.c.l.b16 %v501
  %v570 = vunpack.c.l.b16 %v502
  %v571 = vunpack.c.l.b16 %v503
  %v572 = vunpack.c.l.b16 %v504
  %v573 = vunpack.c.l.b16 %v505
  %v574 = vunpack.c.l.b16 %v506
  %v575 = vunpack.c.l.b16 %v507
  %v576 = vunpack.c.l.b16 %v508
  %v577 = vunpack.c.l.b16 %v509
  %v578 = vunpack.c.l.b16 %v510
  %v579 = vunpack.c.l.b16 %v511
  %v580 = vunpack.c.l.b16 %v512
  %v581 = vunpack.c.l.b16 %v513
  %v582 = vunpack.c.l.b16 %v514
  %v583 = vunpack.c.l.b16 %v515
  %v584 = vunpack.c.l.b16 %v516
  %v585 = vunpack.c.l.b16 %v517
  %v586 = vunpack.c.l.b16 %v518
  %v587 = vunpack.c.l.b16 %v519
  %v588 = vpack.c.b16 %v557, %v556
  %v589 = vpack.c.b16 %v559, %v558
  %v590 = vpack.c.b16 %v561, %v560
  %v591 = vpack.c.b16 %v563, %v562
  %v592 = vpack.c.b16 %v565, %v564
  %v593 = vpack.c.b16 %v567, %v566
  %v594 = vpack.c.b16 %v569, %v568
  %v595 = vpack.c.b16 %v571, %v570
  %v596 = vpack.c.b16 %v573, %v572
  %v597 = vpack.c.b16 %v575, %v574
  %v598 = vpack.c.b16 %v577, %v576
  %v599 = vpack.c.b16 %v579, %v578
  %v600 = vpack.c.b16 %v581, %v580
  %v601 = vpack.c.b16 %v583, %v582
  %v602 = vpack.c.b16 %v585, %v584
  %v603 = vpack.c.b16 %v587, %v586
  %620 = vmatpush.bf16.msra.mxu0 %v595
  %621 = vmatpush.bf16.msra.mxu0 %v594
  %622 = vmatpush.bf16.msra.mxu0 %v593
  %623 = vmatpush.bf16.msra.mxu0 %v592
  %624 = vmatpush.bf16.msra.mxu0 %v591
  %625 = vmatpush.bf16.msra.mxu0 %v590
  %626 = vmatpush.bf16.msra.mxu0 %v589
  %627 = vmatpush.bf16.msra.mxu0 %v588
  %628 = vmatmul.bf16.gmra.mxu0 %v456
  %v629 = vpop.f32.mrf.mxu0
  %v630 = vadd.f32 %v522, %v629
  %v631 = vpop.f32.mrf.mxu0
  %v632 = vadd.f32 %v522, %v631
  %633 = vmatmul.bf16.gmra.mxu0 %v458
  %v634 = vpop.f32.mrf.mxu0
  %v635 = vadd.f32 %v522, %v634
  %v636 = vpop.f32.mrf.mxu0
  %v637 = vadd.f32 %v522, %v636
  %638 = vmatmul.bf16.gmra.mxu0 %v460
  %v639 = vpop.f32.mrf.mxu0
  %v640 = vadd.f32 %v522, %v639
  %v641 = vpop.f32.mrf.mxu0
  %v642 = vadd.f32 %v522, %v641
  %643 = vmatmul.bf16.gmra.mxu0 %v462
  %v644 = vpop.f32.mrf.mxu0
  %v645 = vadd.f32 %v522, %v644
  %v646 = vpop.f32.mrf.mxu0
  %v647 = vadd.f32 %v522, %v646
  %648 = vmatmul.bf16.gmra.mxu0 %v464
  %v649 = vpop.f32.mrf.mxu0
  %v650 = vadd.f32 %v522, %v649
  %v651 = vpop.f32.mrf.mxu0
  %v652 = vadd.f32 %v522, %v651
  %653 = vmatmul.bf16.gmra.mxu0 %v466
  %v654 = vpop.f32.mrf.mxu0
  %v655 = vadd.f32 %v522, %v654
  %v656 = vpop.f32.mrf.mxu0
  %v657 = vadd.f32 %v522, %v656
  %658 = vmatmul.bf16.gmra.mxu0 %v468
  %v659 = vpop.f32.mrf.mxu0
  %v660 = vadd.f32 %v522, %v659
  %v661 = vpop.f32.mrf.mxu0
  %v662 = vadd.f32 %v522, %v661
  %663 = vmatmul.bf16.gmra.mxu0 %v470
  %v664 = vpop.f32.mrf.mxu0
  %v665 = vadd.f32 %v522, %v664
  %v666 = vpop.f32.mrf.mxu0
  %v667 = vadd.f32 %v522, %v666
  %668 = vmatmul.bf16.gmra.mxu0 %v472
  %v669 = vpop.f32.mrf.mxu0
  %v670 = vadd.f32 %v522, %v669
  %v671 = vpop.f32.mrf.mxu0
  %v672 = vadd.f32 %v522, %v671
  %673 = vmatmul.bf16.gmra.mxu0 %v474
  %v674 = vpop.f32.mrf.mxu0
  %v675 = vadd.f32 %v522, %v674
  %v676 = vpop.f32.mrf.mxu0
  %v677 = vadd.f32 %v522, %v676
  %678 = vmatmul.bf16.gmra.mxu0 %v476
  %v679 = vpop.f32.mrf.mxu0
  %v680 = vadd.f32 %v522, %v679
  %v681 = vpop.f32.mrf.mxu0
  %v682 = vadd.f32 %v522, %v681
  %683 = vmatmul.bf16.gmra.mxu0 %v478
  %v684 = vpop.f32.mrf.mxu0
  %v685 = vadd.f32 %v522, %v684
  %v686 = vpop.f32.mrf.mxu0
  %v687 = vadd.f32 %v522, %v686
  %688 = vmatmul.bf16.gmra.mxu0 %v480
  %v689 = vpop.f32.mrf.mxu0
  %v690 = vadd.f32 %v522, %v689
  %v691 = vpop.f32.mrf.mxu0
  %v692 = vadd.f32 %v522, %v691
  %693 = vmatmul.bf16.gmra.mxu0 %v482
  %v694 = vpop.f32.mrf.mxu0
  %v695 = vadd.f32 %v522, %v694
  %v696 = vpop.f32.mrf.mxu0
  %v697 = vadd.f32 %v522, %v696
  %698 = vmatmul.bf16.gmra.mxu0 %v484
  %v699 = vpop.f32.mrf.mxu0
  %v700 = vadd.f32 %v522, %v699
  %v701 = vpop.f32.mrf.mxu0
  %v702 = vadd.f32 %v522, %v701
  %703 = vmatmul.bf16.gmra.mxu0 %v486
  %v704 = vpop.f32.mrf.mxu0
  %v705 = vadd.f32 %v522, %v704
  %v706 = vpop.f32.mrf.mxu0
  %v707 = vadd.f32 %v522, %v706
  %708 = vdwg.mxu0
  %709 = vmatpush.bf16.msra.mxu0 %v603
  %710 = vmatpush.bf16.msra.mxu0 %v602
  %711 = vmatpush.bf16.msra.mxu0 %v601
  %712 = vmatpush.bf16.msra.mxu0 %v600
  %713 = vmatpush.bf16.msra.mxu0 %v599
  %714 = vmatpush.bf16.msra.mxu0 %v598
  %715 = vmatpush.bf16.msra.mxu0 %v597
  %716 = vmatpush.bf16.msra.mxu0 %v596
  %717 = vmatmul.bf16.gmra.mxu0 %v457
  %v718 = vpop.f32.mrf.mxu0
  %v719 = vadd.f32 %v630, %v718
  %v720 = vpop.f32.mrf.mxu0
  %v721 = vadd.f32 %v632, %v720
  %722 = vmatmul.bf16.gmra.mxu0 %v459
  %v723 = vpop.f32.mrf.mxu0
  %v724 = vadd.f32 %v635, %v723
  %v725 = vpop.f32.mrf.mxu0
  %v726 = vadd.f32 %v637, %v725
  %727 = vmatmul.bf16.gmra.mxu0 %v461
  %v728 = vpop.f32.mrf.mxu0
  %v729 = vadd.f32 %v640, %v728
  %v730 = vpop.f32.mrf.mxu0
  %v731 = vadd.f32 %v642, %v730
  %732 = vmatmul.bf16.gmra.mxu0 %v463
  %v733 = vpop.f32.mrf.mxu0
  %v734 = vadd.f32 %v645, %v733
  %v735 = vpop.f32.mrf.mxu0
  %v736 = vadd.f32 %v647, %v735
  %737 = vmatmul.bf16.gmra.mxu0 %v465
  %v738 = vpop.f32.mrf.mxu0
  %v739 = vadd.f32 %v650, %v738
  %v740 = vpop.f32.mrf.mxu0
  %v741 = vadd.f32 %v652, %v740
  %742 = vmatmul.bf16.gmra.mxu0 %v467
  %v743 = vpop.f32.mrf.mxu0
  %v744 = vadd.f32 %v655, %v743
  %v745 = vpop.f32.mrf.mxu0
  %v746 = vadd.f32 %v657, %v745
  %747 = vmatmul.bf16.gmra.mxu0 %v469
  %v748 = vpop.f32.mrf.mxu0
  %v749 = vadd.f32 %v660, %v748
  %v750 = vpop.f32.mrf.mxu0
  %v751 = vadd.f32 %v662, %v750
  %752 = vmatmul.bf16.gmra.mxu0 %v471
  %v753 = vpop.f32.mrf.mxu0
  %v754 = vadd.f32 %v665, %v753
  %v755 = vpop.f32.mrf.mxu0
  %v756 = vadd.f32 %v667, %v755
  %757 = vmatmul.bf16.gmra.mxu0 %v473
  %v758 = vpop.f32.mrf.mxu0
  %v759 = vadd.f32 %v670, %v758
  %v760 = vpop.f32.mrf.mxu0
  %v761 = vadd.f32 %v672, %v760
  %762 = vmatmul.bf16.gmra.mxu0 %v475
  %v763 = vpop.f32.mrf.mxu0
  %v764 = vadd.f32 %v675, %v763
  %v765 = vpop.f32.mrf.mxu0
  %v766 = vadd.f32 %v677, %v765
  %767 = vmatmul.bf16.gmra.mxu0 %v477
  %v768 = vpop.f32.mrf.mxu0
  %v769 = vadd.f32 %v680, %v768
  %v770 = vpop.f32.mrf.mxu0
  %v771 = vadd.f32 %v682, %v770
  %772 = vmatmul.bf16.gmra.mxu0 %v479
  %v773 = vpop.f32.mrf.mxu0
  %v774 = vadd.f32 %v685, %v773
  %v775 = vpop.f32.mrf.mxu0
  %v776 = vadd.f32 %v687, %v775
  %777 = vmatmul.bf16.gmra.mxu0 %v481
  %v778 = vpop.f32.mrf.mxu0
  %v779 = vadd.f32 %v690, %v778
  %v780 = vpop.f32.mrf.mxu0
  %v781 = vadd.f32 %v692, %v780
  %782 = vmatmul.bf16.gmra.mxu0 %v483
  %v783 = vpop.f32.mrf.mxu0
  %v784 = vadd.f32 %v695, %v783
  %v785 = vpop.f32.mrf.mxu0
  %v786 = vadd.f32 %v697, %v785
  %787 = vmatmul.bf16.gmra.mxu0 %v485
  %v788 = vpop.f32.mrf.mxu0
  %v789 = vadd.f32 %v700, %v788
  %v790 = vpop.f32.mrf.mxu0
  %v791 = vadd.f32 %v702, %v790
  %792 = vmatmul.bf16.gmra.mxu0 %v487
  %v793 = vpop.f32.mrf.mxu0
  %v794 = vadd.f32 %v705, %v793
  %v795 = vpop.f32.mrf.mxu0
  %v796 = vadd.f32 %v707, %v795
  %797 = vdwg.mxu0
  %v798 = vtanh.pop %v719
  %v799 = vtanh.pop %v721
  %v800 = vtanh.pop %v724
  %v801 = vtanh.pop %v726
  %v802 = vtanh.pop %v729
  %v803 = vtanh.pop %v731
  %v804 = vtanh.pop %v734
  %v805 = vtanh.pop %v736
  %v806 = vtanh.pop %v739
  %v807 = vtanh.pop %v741
  %v808 = vtanh.pop %v744
  %v809 = vtanh.pop %v746
  %v810 = vtanh.pop %v749
  %v811 = vtanh.pop %v751
  %v812 = vtanh.pop %v754
  %v813 = vtanh.pop %v756
  %v814 = vtanh.pop %v759
  %v815 = vtanh.pop %v761
  %v816 = vtanh.pop %v764
  %v817 = vtanh.pop %v766
  %v818 = vtanh.pop %v769
  %v819 = vtanh.pop %v771
  %v820 = vtanh.pop %v774
  %v821 = vtanh.pop %v776
  %v822 = vtanh.pop %v779
  %v823 = vtanh.pop %v781
  %v824 = vtanh.pop %v784
  %v825 = vtanh.pop %v786
  %v826 = vtanh.pop %v789
  %v827 = vtanh.pop %v791
  %v828 = vtanh.pop %v794
  %v829 = vtanh.pop %v796
  %v830 = vpack.c.bf16 %v799, %v798
  %v831 = vpack.c.bf16 %v801, %v800
  %v832 = vpack.c.bf16 %v803, %v802
  %v833 = vpack.c.bf16 %v805, %v804
  %v834 = vpack.c.bf16 %v807, %v806
  %v835 = vpack.c.bf16 %v809, %v808
  %v836 = vpack.c.bf16 %v811, %v810
  %v837 = vpack.c.bf16 %v813, %v812
  %v838 = vpack.c.bf16 %v815, %v814
  %v839 = vpack.c.bf16 %v817, %v816
  %v840 = vpack.c.bf16 %v819, %v818
  %v841 = vpack.c.bf16 %v821, %v820
  %v842 = vpack.c.bf16 %v823, %v822
  %v843 = vpack.c.bf16 %v825, %v824
  %v844 = vpack.c.bf16 %v827, %v826
  %v845 = vpack.c.bf16 %v829, %v828
  %v846 = vld [vmem:[%s5] sm:$0xf]
  %v847 = vld [vmem:[%s5 + $0x4] sm:$0xf]
  %v848 = vld [vmem:[%s5 + $0x8] sm:$0xf]
  %v849 = vld [vmem:[%s5 + $0xc] sm:$0xf]
  %v850 = vld [vmem:[%s5 + $0x10] sm:$0xf]
  %v851 = vld [vmem:[%s5 + $0x14] sm:$0xf]
  %v852 = vld [vmem:[%s5 + $0x18] sm:$0xf]
  %v853 = vld [vmem:[%s5 + $0x1c] sm:$0xf]
  %v854 = vld [vmem:[%s5 + $0x20] sm:$0xf]
  %v855 = vld [vmem:[%s5 + $0x24] sm:$0xf]
  %v856 = vld [vmem:[%s5 + $0x28] sm:$0xf]
  %v857 = vld [vmem:[%s5 + $0x2c] sm:$0xf]
  %v858 = vld [vmem:[%s5 + $0x30] sm:$0xf]
  %v859 = vld [vmem:[%s5 + $0x34] sm:$0xf]
  %v860 = vld [vmem:[%s5 + $0x38] sm:$0xf]
  %v861 = vld [vmem:[%s5 + $0x3c] sm:$0xf]
  %v862 = vld [vmem:[%s6] sm:$0x1]
  %v864 = vperm.slane %v862, 0
  %v882 = vunpack.c.l.b16 %v846
  %v883 = vunpack.c.l.b16 %v847
  %v884 = vunpack.c.l.b16 %v848
  %v885 = vunpack.c.l.b16 %v849
  %v886 = vunpack.c.l.b16 %v850
  %v887 = vunpack.c.l.b16 %v851
  %v888 = vunpack.c.l.b16 %v852
  %v889 = vunpack.c.l.b16 %v853
  %v890 = vunpack.c.l.b16 %v854
  %v891 = vunpack.c.l.b16 %v855
  %v892 = vunpack.c.l.b16 %v856
  %v893 = vunpack.c.l.b16 %v857
  %v894 = vunpack.c.l.b16 %v858
  %v895 = vunpack.c.l.b16 %v859
  %v896 = vunpack.c.l.b16 %v860
  %v897 = vunpack.c.l.b16 %v861
  %v898 = vpack.c.b16 %v883, %v882
  %v899 = vpack.c.b16 %v885, %v884
  %v900 = vpack.c.b16 %v887, %v886
  %v901 = vpack.c.b16 %v889, %v888
  %v902 = vpack.c.b16 %v891, %v890
  %v903 = vpack.c.b16 %v893, %v892
  %v904 = vpack.c.b16 %v895, %v894
  %v905 = vpack.c.b16 %v897, %v896
  %914 = vmatpush.bf16.msra.mxu0 %v905
  %915 = vmatpush.bf16.msra.mxu0 %v904
  %916 = vmatpush.bf16.msra.mxu0 %v903
  %917 = vmatpush.bf16.msra.mxu0 %v902
  %918 = vmatpush.bf16.msra.mxu0 %v901
  %919 = vmatpush.bf16.msra.mxu0 %v900
  %920 = vmatpush.bf16.msra.mxu0 %v899
  %921 = vmatpush.bf16.msra.mxu0 %v898
  %922 = vmatmul.bf16.gmra.mxu0 %v830
  %v923 = vpop.f32.mrf.mxu0
  %v924 = vadd.f32 %v864, %v923
  %v925 = vpop.f32.mrf.mxu0
  %v926 = vadd.f32 %v864, %v925
  %927 = vmatmul.bf16.gmra.mxu0 %v831
  %v928 = vpop.f32.mrf.mxu0
  %v929 = vadd.f32 %v864, %v928
  %v930 = vpop.f32.mrf.mxu0
  %v931 = vadd.f32 %v864, %v930
  %932 = vmatmul.bf16.gmra.mxu0 %v832
  %v933 = vpop.f32.mrf.mxu0
  %v934 = vadd.f32 %v864, %v933
  %v935 = vpop.f32.mrf.mxu0
  %v936 = vadd.f32 %v864, %v935
  %937 = vmatmul.bf16.gmra.mxu0 %v833
  %v938 = vpop.f32.mrf.mxu0
  %v939 = vadd.f32 %v864, %v938
  %v940 = vpop.f32.mrf.mxu0
  %v941 = vadd.f32 %v864, %v940
  %942 = vmatmul.bf16.gmra.mxu0 %v834
  %v943 = vpop.f32.mrf.mxu0
  %v944 = vadd.f32 %v864, %v943
  %v945 = vpop.f32.mrf.mxu0
  %v946 = vadd.f32 %v864, %v945
  %947 = vmatmul.bf16.gmra.mxu0 %v835
  %v948 = vpop.f32.mrf.mxu0
  %v949 = vadd.f32 %v864, %v948
  %v950 = vpop.f32.mrf.mxu0
  %v951 = vadd.f32 %v864, %v950
  %952 = vmatmul.bf16.gmra.mxu0 %v836
  %v953 = vpop.f32.mrf.mxu0
  %v954 = vadd.f32 %v864, %v953
  %v955 = vpop.f32.mrf.mxu0
  %v956 = vadd.f32 %v864, %v955
  %957 = vmatmul.bf16.gmra.mxu0 %v837
  %v958 = vpop.f32.mrf.mxu0
  %v959 = vadd.f32 %v864, %v958
  %v960 = vpop.f32.mrf.mxu0
  %v961 = vadd.f32 %v864, %v960
  %962 = vmatmul.bf16.gmra.mxu0 %v838
  %v963 = vpop.f32.mrf.mxu0
  %v964 = vadd.f32 %v864, %v963
  %v965 = vpop.f32.mrf.mxu0
  %v966 = vadd.f32 %v864, %v965
  %967 = vmatmul.bf16.gmra.mxu0 %v839
  %v968 = vpop.f32.mrf.mxu0
  %v969 = vadd.f32 %v864, %v968
  %v970 = vpop.f32.mrf.mxu0
  %v971 = vadd.f32 %v864, %v970
  %972 = vmatmul.bf16.gmra.mxu0 %v840
  %v973 = vpop.f32.mrf.mxu0
  %v974 = vadd.f32 %v864, %v973
  %v975 = vpop.f32.mrf.mxu0
  %v976 = vadd.f32 %v864, %v975
  %977 = vmatmul.bf16.gmra.mxu0 %v841
  %v978 = vpop.f32.mrf.mxu0
  %v979 = vadd.f32 %v864, %v978
  %v980 = vpop.f32.mrf.mxu0
  %v981 = vadd.f32 %v864, %v980
  %982 = vmatmul.bf16.gmra.mxu0 %v842
  %v983 = vpop.f32.mrf.mxu0
  %v984 = vadd.f32 %v864, %v983
  %v985 = vpop.f32.mrf.mxu0
  %v986 = vadd.f32 %v864, %v985
  %987 = vmatmul.bf16.gmra.mxu0 %v843
  %v988 = vpop.f32.mrf.mxu0
  %v989 = vadd.f32 %v864, %v988
  %v990 = vpop.f32.mrf.mxu0
  %v991 = vadd.f32 %v864, %v990
  %992 = vmatmul.bf16.gmra.mxu0 %v844
  %v993 = vpop.f32.mrf.mxu0
  %v994 = vadd.f32 %v864, %v993
  %v995 = vpop.f32.mrf.mxu0
  %v996 = vadd.f32 %v864, %v995
  %997 = vmatmul.bf16.gmra.mxu0 %v845
  %v998 = vpop.f32.mrf.mxu0
  %v999 = vadd.f32 %v864, %v998
  %v1000 = vpop.f32.mrf.mxu0
  %v1001 = vadd.f32 %v864, %v1000
  %1002 = vdwg.mxu0
  %v1003 = vtanh.pop %v924
  %v1004 = vtanh.pop %v926
  %v1005 = vtanh.pop %v929
  %v1006 = vtanh.pop %v931
  %v1007 = vtanh.pop %v934
  %v1008 = vtanh.pop %v936
  %v1009 = vtanh.pop %v939
  %v1010 = vtanh.pop %v941
  %v1011 = vtanh.pop %v944
  %v1012 = vtanh.pop %v946
  %v1013 = vtanh.pop %v949
  %v1014 = vtanh.pop %v951
  %v1015 = vtanh.pop %v954
  %v1016 = vtanh.pop %v956
  %v1017 = vtanh.pop %v959
  %v1018 = vtanh.pop %v961
  %v1019 = vtanh.pop %v964
  %v1020 = vtanh.pop %v966
  %v1021 = vtanh.pop %v969
  %v1022 = vtanh.pop %v971
  %v1023 = vtanh.pop %v974
  %v1024 = vtanh.pop %v976
  %v1025 = vtanh.pop %v979
  %v1026 = vtanh.pop %v981
  %v1027 = vtanh.pop %v984
  %v1028 = vtanh.pop %v986
  %v1029 = vtanh.pop %v989
  %v1030 = vtanh.pop %v991
  %v1031 = vtanh.pop %v994
  %v1032 = vtanh.pop %v996
  %v1033 = vtanh.pop %v999
  %v1034 = vtanh.pop %v1001
  %v1035 = vld [vmem:[%s7] sm:$0x1]
  %v1037 = vperm.slane %v1035, 0
  %v1039 = vmul.f32 %v1003, %v1037
  %v1040 = vmul.f32 %v1004, %v1037
  %v1041 = vmul.f32 %v1005, %v1037
  %v1042 = vmul.f32 %v1006, %v1037
  %v1043 = vmul.f32 %v1007, %v1037
  %v1044 = vmul.f32 %v1008, %v1037
  %v1045 = vmul.f32 %v1009, %v1037
  %v1046 = vmul.f32 %v1010, %v1037
  %v1047 = vmul.f32 %v1011, %v1037
  %v1048 = vmul.f32 %v1012, %v1037
  %v1049 = vmul.f32 %v1013, %v1037
  %v1050 = vmul.f32 %v1014, %v1037
  %v1051 = vmul.f32 %v1015, %v1037
  %v1052 = vmul.f32 %v1016, %v1037
  %v1053 = vmul.f32 %v1017, %v1037
  %v1054 = vmul.f32 %v1018, %v1037
  %v1055 = vmul.f32 %v1019, %v1037
  %v1056 = vmul.f32 %v1020, %v1037
  %v1057 = vmul.f32 %v1021, %v1037
  %v1058 = vmul.f32 %v1022, %v1037
  %v1059 = vmul.f32 %v1023, %v1037
  %v1060 = vmul.f32 %v1024, %v1037
  %v1061 = vmul.f32 %v1025, %v1037
  %v1062 = vmul.f32 %v1026, %v1037
  %v1063 = vmul.f32 %v1027, %v1037
  %v1064 = vmul.f32 %v1028, %v1037
  %v1065 = vmul.f32 %v1029, %v1037
  %v1066 = vmul.f32 %v1030, %v1037
  %v1067 = vmul.f32 %v1031, %v1037
  %v1068 = vmul.f32 %v1032, %v1037
  %v1069 = vmul.f32 %v1033, %v1037
  %v1070 = vmul.f32 %v1034, %v1037
  %vm1071 = vcmask 523264
  %v1072 = vsel %vm1071, %v1039, 0.0
  %1073 = vadd.xlane.f32.xlu0 %v1072
  %v1074 = vpop.xlane.xlu0 %1073
  %v1075 = vsel %vm1071, %v1040, 0.0
  %1076 = vadd.xlane.f32.xlu0 %v1075
  %v1077 = vpop.xlane.xlu0 %1076
  %v1078 = vsel %vm1071, %v1041, 0.0
  %1079 = vadd.xlane.f32.xlu0 %v1078
  %v1080 = vpop.xlane.xlu0 %1079
  %v1081 = vsel %vm1071, %v1042, 0.0
  %1082 = vadd.xlane.f32.xlu0 %v1081
  %v1083 = vpop.xlane.xlu0 %1082
  %v1084 = vsel %vm1071, %v1043, 0.0
  %1085 = vadd.xlane.f32.xlu0 %v1084
  %v1086 = vpop.xlane.xlu0 %1085
  %v1087 = vsel %vm1071, %v1044, 0.0
  %1088 = vadd.xlane.f32.xlu0 %v1087
  %v1089 = vpop.xlane.xlu0 %1088
  %v1090 = vsel %vm1071, %v1045, 0.0
  %1091 = vadd.xlane.f32.xlu0 %v1090
  %v1092 = vpop.xlane.xlu0 %1091
  %v1093 = vsel %vm1071, %v1046, 0.0
  %1094 = vadd.xlane.f32.xlu0 %v1093
  %v1095 = vpop.xlane.xlu0 %1094
  %v1096 = vsel %vm1071, %v1047, 0.0
  %1097 = vadd.xlane.f32.xlu0 %v1096
  %v1098 = vpop.xlane.xlu0 %1097
  %v1099 = vsel %vm1071, %v1048, 0.0
  %1100 = vadd.xlane.f32.xlu0 %v1099
  %v1101 = vpop.xlane.xlu0 %1100
  %v1102 = vsel %vm1071, %v1049, 0.0
  %1103 = vadd.xlane.f32.xlu0 %v1102
  %v1104 = vpop.xlane.xlu0 %1103
  %v1105 = vsel %vm1071, %v1050, 0.0
  %1106 = vadd.xlane.f32.xlu0 %v1105
  %v1107 = vpop.xlane.xlu0 %1106
  %v1108 = vsel %vm1071, %v1051, 0.0
  %1109 = vadd.xlane.f32.xlu0 %v1108
  %v1110 = vpop.xlane.xlu0 %1109
  %v1111 = vsel %vm1071, %v1052, 0.0
  %1112 = vadd.xlane.f32.xlu0 %v1111
  %v1113 = vpop.xlane.xlu0 %1112
  %v1114 = vsel %vm1071, %v1053, 0.0
  %1115 = vadd.xlane.f32.xlu0 %v1114
  %v1116 = vpop.xlane.xlu0 %1115
  %v1117 = vsel %vm1071, %v1054, 0.0
  %1118 = vadd.xlane.f32.xlu0 %v1117
  %v1119 = vpop.xlane.xlu0 %1118
  %v1120 = vsel %vm1071, %v1055, 0.0
  %1121 = vadd.xlane.f32.xlu0 %v1120
  %v1122 = vpop.xlane.xlu0 %1121
  %v1123 = vsel %vm1071, %v1056, 0.0
  %1124 = vadd.xlane.f32.xlu0 %v1123
  %v1125 = vpop.xlane.xlu0 %1124
  %v1126 = vsel %vm1071, %v1057, 0.0
  %1127 = vadd.xlane.f32.xlu0 %v1126
  %v1128 = vpop.xlane.xlu0 %1127
  %v1129 = vsel %vm1071, %v1058, 0.0
  %1130 = vadd.xlane.f32.xlu0 %v1129
  %v1131 = vpop.xlane.xlu0 %1130
  %v1132 = vsel %vm1071, %v1059, 0.0
  %1133 = vadd.xlane.f32.xlu0 %v1132
  %v1134 = vpop.xlane.xlu0 %1133
  %v1135 = vsel %vm1071, %v1060, 0.0
  %1136 = vadd.xlane.f32.xlu0 %v1135
  %v1137 = vpop.xlane.xlu0 %1136
  %v1138 = vsel %vm1071, %v1061, 0.0
  %1139 = vadd.xlane.f32.xlu0 %v1138
  %v1140 = vpop.xlane.xlu0 %1139
  %v1141 = vsel %vm1071, %v1062, 0.0
  %1142 = vadd.xlane.f32.xlu0 %v1141
  %v1143 = vpop.xlane.xlu0 %1142
  %v1144 = vsel %vm1071, %v1063, 0.0
  %1145 = vadd.xlane.f32.xlu0 %v1144
  %v1146 = vpop.xlane.xlu0 %1145
  %v1147 = vsel %vm1071, %v1064, 0.0
  %1148 = vadd.xlane.f32.xlu0 %v1147
  %v1149 = vpop.xlane.xlu0 %1148
  %v1150 = vsel %vm1071, %v1065, 0.0
  %1151 = vadd.xlane.f32.xlu0 %v1150
  %v1152 = vpop.xlane.xlu0 %1151
  %v1153 = vsel %vm1071, %v1066, 0.0
  %1154 = vadd.xlane.f32.xlu0 %v1153
  %v1155 = vpop.xlane.xlu0 %1154
  %v1156 = vsel %vm1071, %v1067, 0.0
  %1157 = vadd.xlane.f32.xlu0 %v1156
  %v1158 = vpop.xlane.xlu0 %1157
  %v1159 = vsel %vm1071, %v1068, 0.0
  %1160 = vadd.xlane.f32.xlu0 %v1159
  %v1161 = vpop.xlane.xlu0 %1160
  %v1162 = vsel %vm1071, %v1069, 0.0
  %1163 = vadd.xlane.f32.xlu0 %v1162
  %v1164 = vpop.xlane.xlu0 %1163
  %v1165 = vsel %vm1071, %v1070, 0.0
  %1166 = vadd.xlane.f32.xlu0 %v1165
  %v1167 = vpop.xlane.xlu0 %1166
  %v1168 = vld [vmem:[#allocation2] sm:$0x1]
  %v1170 = vperm.slane %v1168, 0
  %v1172 = vadd.f32 %v1074, %v1170
  %v1173 = vadd.f32 %v1077, %v1170
  %v1174 = vadd.f32 %v1080, %v1170
  %v1175 = vadd.f32 %v1083, %v1170
  %v1176 = vadd.f32 %v1086, %v1170
  %v1177 = vadd.f32 %v1089, %v1170
  %v1178 = vadd.f32 %v1092, %v1170
  %v1179 = vadd.f32 %v1095, %v1170
  %v1180 = vadd.f32 %v1098, %v1170
  %v1181 = vadd.f32 %v1101, %v1170
  %v1182 = vadd.f32 %v1104, %v1170
  %v1183 = vadd.f32 %v1107, %v1170
  %v1184 = vadd.f32 %v1110, %v1170
  %v1185 = vadd.f32 %v1113, %v1170
  %v1186 = vadd.f32 %v1116, %v1170
  %v1187 = vadd.f32 %v1119, %v1170
  %v1188 = vadd.f32 %v1122, %v1170
  %v1189 = vadd.f32 %v1125, %v1170
  %v1190 = vadd.f32 %v1128, %v1170
  %v1191 = vadd.f32 %v1131, %v1170
  %v1192 = vadd.f32 %v1134, %v1170
  %v1193 = vadd.f32 %v1137, %v1170
  %v1194 = vadd.f32 %v1140, %v1170
  %v1195 = vadd.f32 %v1143, %v1170
  %v1196 = vadd.f32 %v1146, %v1170
  %v1197 = vadd.f32 %v1149, %v1170
  %v1198 = vadd.f32 %v1152, %v1170
  %v1199 = vadd.f32 %v1155, %v1170
  %v1200 = vadd.f32 %v1158, %v1170
  %v1201 = vadd.f32 %v1161, %v1170
  %v1202 = vadd.f32 %v1164, %v1170
  %v1203 = vadd.f32 %v1167, %v1170
  %v1204 = vtanh.pop %v1172
  %v1205 = vtanh.pop %v1173
  %v1206 = vtanh.pop %v1174
  %v1207 = vtanh.pop %v1175
  %v1208 = vtanh.pop %v1176
  %v1209 = vtanh.pop %v1177
  %v1210 = vtanh.pop %v1178
  %v1211 = vtanh.pop %v1179
  %v1212 = vtanh.pop %v1180
  %v1213 = vtanh.pop %v1181
  %v1214 = vtanh.pop %v1182
  %v1215 = vtanh.pop %v1183
  %v1216 = vtanh.pop %v1184
  %v1217 = vtanh.pop %v1185
  %v1218 = vtanh.pop %v1186
  %v1219 = vtanh.pop %v1187
  %v1220 = vtanh.pop %v1188
  %v1221 = vtanh.pop %v1189
  %v1222 = vtanh.pop %v1190
  %v1223 = vtanh.pop %v1191
  %v1224 = vtanh.pop %v1192
  %v1225 = vtanh.pop %v1193
  %v1226 = vtanh.pop %v1194
  %v1227 = vtanh.pop %v1195
  %v1228 = vtanh.pop %v1196
  %v1229 = vtanh.pop %v1197
  %v1230 = vtanh.pop %v1198
  %v1231 = vtanh.pop %v1199
  %v1232 = vtanh.pop %v1200
  %v1233 = vtanh.pop %v1201
  %v1234 = vtanh.pop %v1202
  %v1235 = vtanh.pop %v1203
  %vm1236 = vcmask 7168
  %1237 = vst.msk [vmem:[%s9] sm:$0xff] %vm1236, %v1204
  %1238 = vst.msk [vmem:[%s9 + $0x8] sm:$0xff] %vm1236, %v1205
  %1239 = vst.msk [vmem:[%s9 + $0x10] sm:$0xff] %vm1236, %v1206
  %1240 = vst.msk [vmem:[%s9 + $0x18] sm:$0xff] %vm1236, %v1207
  %1241 = vst.msk [vmem:[%s9 + $0x20] sm:$0xff] %vm1236, %v1208
  %1242 = vst.msk [vmem:[%s9 + $0x28] sm:$0xff] %vm1236, %v1209
  %1243 = vst.msk [vmem:[%s9 + $0x30] sm:$0xff] %vm1236, %v1210
  %1244 = vst.msk [vmem:[%s9 + $0x38] sm:$0xff] %vm1236, %v1211
  %1245 = vst.msk [vmem:[%s9 + $0x40] sm:$0xff] %vm1236, %v1212
  %1246 = vst.msk [vmem:[%s9 + $0x48] sm:$0xff] %vm1236, %v1213
  %1247 = vst.msk [vmem:[%s9 + $0x50] sm:$0xff] %vm1236, %v1214
  %1248 = vst.msk [vmem:[%s9 + $0x58] sm:$0xff] %vm1236, %v1215
  %1249 = vst.msk [vmem:[%s9 + $0x60] sm:$0xff] %vm1236, %v1216
  %1250 = vst.msk [vmem:[%s9 + $0x68] sm:$0xff] %vm1236, %v1217
  %1251 = vst.msk [vmem:[%s9 + $0x70] sm:$0xff] %vm1236, %v1218
  %1252 = vst.msk [vmem:[%s9 + $0x78] sm:$0xff] %vm1236, %v1219
  %1253 = vst.msk [vmem:[%s9 + $0x80] sm:$0xff] %vm1236, %v1220
  %1254 = vst.msk [vmem:[%s9 + $0x88] sm:$0xff] %vm1236, %v1221
  %1255 = vst.msk [vmem:[%s9 + $0x90] sm:$0xff] %vm1236, %v1222
  %1256 = vst.msk [vmem:[%s9 + $0x98] sm:$0xff] %vm1236, %v1223
  %1257 = vst.msk [vmem:[%s9 + $0xa0] sm:$0xff] %vm1236, %v1224
  %1258 = vst.msk [vmem:[%s9 + $0xa8] sm:$0xff] %vm1236, %v1225
  %1259 = vst.msk [vmem:[%s9 + $0xb0] sm:$0xff] %vm1236, %v1226
  %1260 = vst.msk [vmem:[%s9 + $0xb8] sm:$0xff] %vm1236, %v1227
  %1261 = vst.msk [vmem:[%s9 + $0xc0] sm:$0xff] %vm1236, %v1228
  %1262 = vst.msk [vmem:[%s9 + $0xc8] sm:$0xff] %vm1236, %v1229
  %1263 = vst.msk [vmem:[%s9 + $0xd0] sm:$0xff] %vm1236, %v1230
  %1264 = vst.msk [vmem:[%s9 + $0xd8] sm:$0xff] %vm1236, %v1231
  %1265 = vst.msk [vmem:[%s9 + $0xe0] sm:$0xff] %vm1236, %v1232
  %1266 = vst.msk [vmem:[%s9 + $0xe8] sm:$0xff] %vm1236, %v1233
  %1267 = vst.msk [vmem:[%s9 + $0xf0] sm:$0xff] %vm1236, %v1234
  %1268 = vst.msk [vmem:[%s9 + $0xf8] sm:$0xff] %vm1236, %v1235
  // Predicated region
  $region38: #{tpu_custom_call.1} parent=0 // pred_check
    _
  $region39: #{tpu_custom_call.1} parent=0 // pred_check_branch
    %1270 = sbr.rel (0) target = $region41
  $region40: #{tpu_custom_call.1} parent=0 // pred_region
    _
  $region41: #{tpu_custom_call.1} parent=0 // pred_fallthru
    _
  // Predicated region
  $region42: #{tpu_custom_call.1} parent=0 // pred_check
    _
  $region43: #{tpu_custom_call.1} parent=0 // pred_check_branch
    %1272 = sbr.rel (0) target = $region45
  $region44: #{tpu_custom_call.1} parent=0 // pred_region
    _
  $region45: #{tpu_custom_call.1} parent=0 // pred_fallthru
    _

</llo_original>
